<compile_context>
chip_gen: v7x
topology: tpu7x:2x2x1
jax: 0.10.0
libtpu: 0.0.40
codegen_flags: <defaults>
</compile_context>

<pallas_src>
import functools

import jax
import jax.numpy as jnp
from jax import lax
from jax.experimental import pallas as pl
from jax.experimental.pallas import tpu as pltpu


_LANE = 128
_SUBLANE = 8
_MAX_LANE_BLOCK = 4096          # lane-dense tiles -> unmasked vst, good roofline
_MAX_TILE_ELEMS = 512 * 1024    # 2 MiB f32 per tile -> 4 live buffers ~ 8 MiB
                                # (safe on v7x 64 MiB VMEM and on v5e/v6e)


def _divisor_block(extent, unit, cap):
    """Largest multiple of `unit` that divides `extent` and is <= cap.

    Falls back to the full extent when extent <= cap or when extent is not a
    multiple of `unit` (to satisfy the (8,128) block-shape rule)."""
    cap = int(cap)
    if extent <= cap:
        return extent
    if extent % unit != 0:
        return extent
    best = unit
    b = unit
    while b <= cap:
        if extent % b == 0:
            best = b
        b += unit
    return best


def _half_dropout_kernel(seed_ref, x_ref, o_ref, *, threshold, scale,
                         ch_block, hw_block, ch_half, hw_total):
    """One (ch_block, hw_block) tile of the dropout half.

    seed_ref: (1,) int32 scalar-prefetch (SMEM).
    x_ref / o_ref: (ch_block, hw_block) VMEM tiles (same HBM buffer, aliased).
    """
    n = pl.program_id(0)    # batch index
    cb = pl.program_id(1)   # channel-block index within the dropout half
    wb = pl.program_id(2)   # lane-block index within H*W

    x = x_ref[...]

    # Global element index inside the dropout half -> stateless counter-based
    # PRNG: identical mask for any tiling, no per-tile reseeding needed.
    row = lax.broadcasted_iota(jnp.int32, (ch_block, hw_block), 0) + cb * ch_block
    col = lax.broadcasted_iota(jnp.int32, (ch_block, hw_block), 1) + wb * hw_block
    gidx = ((n * ch_half + row) * hw_total + col).astype(jnp.uint32)

    # lowbias32-style integer hash, mixed with the seed. Pure VPU int ops.
    h = gidx ^ (seed_ref[0].astype(jnp.uint32) * jnp.uint32(0x9E3779B9))
    h = (h ^ (h >> 16)) * jnp.uint32(0x7FEB352D)
    h = (h ^ (h >> 15)) * jnp.uint32(0x846CA68B)
    h = h ^ (h >> 16)

    # Keep with probability (1 - p): single unsigned compare, no float path.
    keep = h >= jnp.uint32(threshold)
    mult = jnp.where(keep, jnp.float32(scale), jnp.float32(0.0))
    o_ref[...] = (x * mult).astype(o_ref.dtype)


def half_dropout(x, seed, p=0.3, training=True):
    """out[:, :C//2] = inverted_dropout(x[:, :C//2], p); out[:, C//2:] = x[:, C//2:]."""
    if not training or p <= 0.0:
        return x
    N, C, H, W = x.shape
    assert C % 2 == 0, "channel dim must be even for the half split"
    ch_half = C // 2
    hw = H * W

    # Row 2n   -> x[n, :C//2]  (dropout half, visited by the grid)
    # Row 2n+1 -> x[n, C//2:]  (passthrough half, never DMA'd; kept via aliasing)
    x3 = x.reshape(N * 2, ch_half, hw)

    hw_block = _divisor_block(hw, _LANE, _MAX_LANE_BLOCK)
    ch_cap = max(_SUBLANE, _MAX_TILE_ELEMS // hw_block)
    ch_block = _divisor_block(ch_half, _SUBLANE, ch_cap)
    grid = (N, ch_half // ch_block, hw // hw_block)

    threshold = min(int(round(p * (1 << 32))), (1 << 32) - 1)
    kernel = functools.partial(
        _half_dropout_kernel,
        threshold=threshold,
        scale=1.0 / (1.0 - p),
        ch_block=ch_block,
        hw_block=hw_block,
        ch_half=ch_half,
        hw_total=hw,
    )

    # Index map only ever selects even rows (the dropout half); the trailing
    # argument is the scalar-prefetch seed ref (unused for indexing).
    block_spec = pl.BlockSpec((None, ch_block, hw_block),
                              lambda n, c, w, seed_ref: (2 * n, c, w))

    out3 = pl.pallas_call(
        kernel,
        out_shape=jax.ShapeDtypeStruct(x3.shape, x3.dtype),
        grid_spec=pltpu.PrefetchScalarGridSpec(
            num_scalar_prefetch=1,
            grid=grid,
            in_specs=[block_spec],
            out_specs=block_spec,
        ),
        # Output buffer is the input buffer: passthrough rows keep their input
        # values without ever being read or written by the kernel.
        input_output_aliases={1: 0},
        compiler_params=pltpu.CompilerParams(
            dimension_semantics=("parallel", "parallel", "parallel")),
    )(jnp.asarray([seed], dtype=jnp.int32), x3)

    return out3.reshape(N, C, H, W)


if __name__ == "__main__":
    key = jax.random.PRNGKey(0)
    N, C, H, W = 2, 4, 16, 16
    x = jax.random.normal(key, (N, C, H, W), dtype=jnp.float32)

    p = 0.3
    out = half_dropout(x, seed=0, p=p, training=True)
    out = jax.block_until_ready(out)
    assert out.shape == x.shape and out.dtype == x.dtype

    scale = 1.0 / (1.0 - p)
    a_in, b_in = x[:, : C // 2], x[:, C // 2:]
    a_out, b_out = out[:, : C // 2], out[:, C // 2:]

    # Second half must be an exact passthrough.
    assert jnp.array_equal(b_out, b_in)
    # First-half elements are either zeroed or scaled copies of the input.
    is_zero = a_out == 0.0
    is_scaled = jnp.isclose(a_out, a_in * scale, rtol=1e-5, atol=1e-6)
    assert bool(jnp.all(is_zero | is_scaled))
    # Dropout is actually happening (p=0.3 over 1024 elements): some kept,
    # some dropped.
    kept = int(jnp.sum(is_scaled & ~is_zero))
    dropped = int(jnp.sum(is_zero))
    assert kept > 0 and dropped > 0

    print("KERNEL_OK")
</pallas_src>

<mosaic_0001>
module attributes {stable_mosaic.version = 11 : i64} {
  func.func @_half_dropout_kernel(%arg0: i32, %arg1: i32, %arg2: i32, %arg3: memref<1xi32, #tpu.memory_space<smem>>, %arg4: memref<1x2x256xf32, #tpu.memory_space<vmem>>, %arg5: memref<1x2x256xf32, #tpu.memory_space<vmem>>) attributes {dimension_semantics = [#tpu.dimension_semantics<parallel>, #tpu.dimension_semantics<parallel>, #tpu.dimension_semantics<parallel>], iteration_bounds = array<i64: 2, 1, 1>, scalar_prefetch = 1 : i64, scratch_operands = 0 : i64, tpu.core_type = #tpu.core_type<tc>, window_params = [{transform_indices = @transform_0, window_bounds = array<i64: 1, 2, 256>}, {transform_indices = @transform_1, window_bounds = array<i64: 1, 2, 256>}]} {
    %c0 = arith.constant 0 : index
    %c0_0 = arith.constant 0 : index
    %c0_1 = arith.constant 0 : index
    %0 = vector.load %arg4[%c0, %c0_0, %c0_1] : memref<1x2x256xf32, #tpu.memory_space<vmem>>, vector<1x2x256xf32>
    %1 = vector.shape_cast %0 : vector<1x2x256xf32> to vector<2x256xf32>
    %2 = tpu.iota {dimensions = array<i32: 0>} : vector<2x256xi32>
    %c2_i32 = arith.constant 2 : i32
    %3 = arith.muli %arg1, %c2_i32 : i32
    %4 = vector.broadcast %3 : i32 to vector<2x256xi32>
    %5 = arith.addi %2, %4 : vector<2x256xi32>
    %6 = tpu.iota {dimensions = array<i32: 1>} : vector<2x256xi32>
    %c256_i32 = arith.constant 256 : i32
    %7 = arith.muli %arg2, %c256_i32 : i32
    %8 = vector.broadcast %7 : i32 to vector<2x256xi32>
    %9 = arith.addi %6, %8 : vector<2x256xi32>
    %c2_i32_2 = arith.constant 2 : i32
    %10 = arith.muli %arg0, %c2_i32_2 : i32
    %11 = vector.broadcast %10 : i32 to vector<2x256xi32>
    %12 = arith.addi %11, %5 : vector<2x256xi32>
    %c256_i32_3 = arith.constant 256 : i32
    %13 = vector.broadcast %c256_i32_3 : i32 to vector<2x256xi32>
    %14 = arith.muli %12, %13 : vector<2x256xi32>
    %15 = arith.addi %14, %9 : vector<2x256xi32>
    %c0_4 = arith.constant 0 : index
    %16 = memref.load %arg3[%c0_4] : memref<1xi32, #tpu.memory_space<smem>>
    %c-1640531527_i32 = arith.constant -1640531527 : i32
    %17 = arith.muli %16, %c-1640531527_i32 : i32
    %18 = vector.broadcast %17 : i32 to vector<2x256xi32>
    %19 = arith.xori %15, %18 : vector<2x256xi32>
    %c16_i32 = arith.constant 16 : i32
    %20 = vector.broadcast %c16_i32 : i32 to vector<2x256xi32>
    %21 = arith.shrui %19, %20 : vector<2x256xi32>
    %22 = arith.xori %19, %21 : vector<2x256xi32>
    %c2146121005_i32 = arith.constant 2146121005 : i32
    %23 = vector.broadcast %c2146121005_i32 : i32 to vector<2x256xi32>
    %24 = arith.muli %22, %23 : vector<2x256xi32>
    %c15_i32 = arith.constant 15 : i32
    %25 = vector.broadcast %c15_i32 : i32 to vector<2x256xi32>
    %26 = arith.shrui %24, %25 : vector<2x256xi32>
    %27 = arith.xori %24, %26 : vector<2x256xi32>
    %c-2073254261_i32 = arith.constant -2073254261 : i32
    %28 = vector.broadcast %c-2073254261_i32 : i32 to vector<2x256xi32>
    %29 = arith.muli %27, %28 : vector<2x256xi32>
    %c16_i32_5 = arith.constant 16 : i32
    %30 = vector.broadcast %c16_i32_5 : i32 to vector<2x256xi32>
    %31 = arith.shrui %29, %30 : vector<2x256xi32>
    %32 = arith.xori %29, %31 : vector<2x256xi32>
    %c1288490189_i32 = arith.constant 1288490189 : i32
    %33 = vector.broadcast %c1288490189_i32 : i32 to vector<2x256xi32>
    %34 = arith.cmpi uge, %32, %33 : vector<2x256xi32>
    %cst = arith.constant 1.42857146 : f32
    %cst_6 = arith.constant 0.000000e+00 : f32
    %35 = vector.broadcast %cst : f32 to vector<2x256xf32>
    %36 = vector.broadcast %cst_6 : f32 to vector<2x256xf32>
    %37 = arith.select %34, %35, %36 : vector<2x256xi1>, vector<2x256xf32>
    %38 = arith.mulf %1, %37 : vector<2x256xf32>
    %c0_7 = arith.constant 0 : index
    %c0_8 = arith.constant 0 : index
    %c0_9 = arith.constant 0 : index
    %39 = vector.load %arg5[%c0_7, %c0_8, %c0_9] : memref<1x2x256xf32, #tpu.memory_space<vmem>>, vector<1x2x256xf32>
    %40 = vector.shape_cast %39 : vector<1x2x256xf32> to vector<2x256xf32>
    %41 = vector.shape_cast %38 : vector<2x256xf32> to vector<1x2x256xf32>
    tpu.vector_store %arg5[%c0_7, %c0_8, %c0_9], %41 {strides = array<i32>} : memref<1x2x256xf32, #tpu.memory_space<vmem>>, vector<1x2x256xf32>,
    return
  }
  func.func @transform_0(%arg0: i32, %arg1: i32, %arg2: i32, %arg3: memref<1xi32, #tpu.memory_space<smem>>) -> (i32, i32, i32) {
    %c2_i32 = arith.constant 2 : i32
    %0 = arith.muli %c2_i32, %arg0 : i32
    %c0_i32 = arith.constant 0 : i32
    return %0, %arg1, %arg2 : i32, i32, i32
  }
  func.func @transform_1(%arg0: i32, %arg1: i32, %arg2: i32, %arg3: memref<1xi32, #tpu.memory_space<smem>>) -> (i32, i32, i32) {
    %c2_i32 = arith.constant 2 : i32
    %0 = arith.muli %c2_i32, %arg0 : i32
    %c0_i32 = arith.constant 0 : i32
    return %0, %arg1, %arg2 : i32, i32, i32
  }
}

</mosaic_0001>

<llo_original>
// kernel: tpu_custom_call.1
$region0: #{tpu_custom_call.1}
  #allocation0 [shape = 'u32[]', space=smem, size = 0x4, offset = 0x4, fixed_abs, tag = 'smem constant byte address 0x4 - core index']
  #allocation1 [shape = 'u32[144,128]{1,0:T(1,128)}', space=vmem, size = 0x12000, scoped, tag = 'internal scratch']
  #allocation2 [shape = 's32[1]{0}', space=sflag, size = 0x4, scoped, tag = 'scoped memory for tpu_custom_call.1']
  #allocation3 [shape = 's32[1]{0:T(128)S(6)}', space=smem, size = 0x200, scoped, tag = 'prefetched SMEM operand 0']
  %s0 = inlined_call_operand.<no memory space> [shape: s32[1], index: 0, kind: input, shape index: {}]
  %s1 = inlined_call_operand.hbm [shape: f32[4,2,256], index: 1, kind: input, shape index: {}, may-alias: {1,2}]
  %s2 = inlined_call_operand.hbm [shape: f32[4,2,256], index: 2, kind: output, shape index: {}, may-alias: {1,2}]
  %s3 = sld [smem:[#allocation0]]
  $region41: #{tpu_custom_call.1} parent=0
    _
  %s5 = ssub.s32 1, %s3
  %s6 = scalar_select 0, %s5, %s3
  %7 = sst [smem:[#allocation3]] %s0
  $region1: #{tpu_custom_call.1} parent=0
    #allocation4 [shape = 'u8[4096]{0}', space=vmem, size = 0x1000, scoped, tag = 'input window, operand 1']
    #allocation5 [shape = 's32[2]{0}', space=sflag, size = 0x8, scoped, tag = 'scoped memory for tpu_custom_call.1']
    #allocation6 [shape = 's32[2]{0}', space=sflag, size = 0x8, scoped, tag = 'scoped memory for tpu_custom_call.1']
    #allocation7 [shape = 'u8[4096]{0}', space=vmem, size = 0x1000, scoped, tag = 'output window, operand 0']
    %8 = vsyncpa [#allocation5], 0
    %s9 = scalar_lea.sflag [#allocation5], 1
    %10 = vsyncpa %s9, 0
    %11 = vsyncpa [#allocation6], 0
    %s12 = scalar_lea.sflag [#allocation6], 1
    %13 = vsyncpa %s12, 0
    loop: start=0, step=1, limit=4
    $region2: #{tpu_custom_call.1} parent=1 // loop_pre_header
      _
    $region3: #{tpu_custom_call.1} parent=1 // loop_header
      %s15 = sphi 0, %s19
      %p16 = scmp.ge.s32.totalorder %s15, 4
      %s22 = sphi 0, %s41
      %s23 = sphi 0, %s37
      %s24 = sphi 0, %s33
      %s25 = sphi 0, %s22
      %s26 = sphi 0, %s23
      %s27 = sphi 0, %s24
      %s28 = sphi 0, %s25
      %s29 = sphi 0, %s26
      %s30 = sphi 0, %s27
      %s50 = sphi 0, %s52
      %s53 = sphi 0, %s50
      %s54 = sphi 0, %s53
      %s70 = sphi 0, %s54
      %s82 = sphi 0, %s84
      %s85 = sphi 0, %s82
      %s86 = sphi 0, %s85
      %s102 = sphi 0, %s86
    $region4: #{tpu_custom_call.1} parent=1 // loop_header_branch
      %18 = sbr.rel (%p16) target = $region8
    $region5: #{tpu_custom_call.1} parent=1 // loop_body
      %s20 = ssub.s32 %s15, 1
      %s21 = ssub.s32 %s15, 2
      %s31 = sadd.s32 1, %s24
      %p32 = scmp.ge.s32.totalorder %s31, 1
      %s33 = scalar_select %p32, 0, %s31
      %s34 = sadd.s32 1, %s23
      %s35 = scalar_select %p32, %s34, %s23
      %p36 = scmp.ge.s32.totalorder %s35, 1
      %s37 = scalar_select %p36, 0, %s35
      %s38 = sadd.s32 1, %s22
      %s39 = scalar_select %p36, %s38, %s22
      %p40 = scmp.ge.s32.totalorder %s39, 2
      %s41 = scalar_select %p40, 0, %s39
      %s42 = smul.u32 %s22, 2
      %s43 = smul.u32 %s41, 2
      %s44 = ssub.s32 %s42, %s43
      %s45 = ssub.s32 %s23, %s37
      %s46 = sor.u32 %s44, %s45
      %s47 = ssub.s32 %s24, %s33
      %s48 = sor.u32 %s46, %s47
      %p49 = scmp.eq.s32.totalorder %s48, 0
      %s51 = sadd.s32 %s50, 1
      %s52 = scalar_select %p49, %s50, %s51
      %p55 = pneg %p49
      %p56 = scmp.eq.s32.totalorder %s15, 1
      %p57 = por %p55, %p56
      %p58 = scmp.ne.s32.totalorder %s50, %s53
      %p59 = scmp.eq.s32.totalorder %s15, 0
      %p60 = por %p58, %p59
      %p61 = scmp.ne.s32.totalorder %s50, %s53
      %p62 = scmp.eq.s32.totalorder %s20, 1
      %p63 = por %p61, %p62
      %p64 = scmp.ne.s32.totalorder %s53, %s54
      %p65 = scmp.eq.s32.totalorder %s20, 0
      %p66 = por %p64, %p65
      %p67 = scmp.ne.s32.totalorder %s53, %s54
      %p68 = scmp.eq.s32.totalorder %s21, 1
      %p69 = por %p67, %p68
      %p71 = scmp.ne.s32.totalorder %s54, %s70
      %p72 = scmp.eq.s32.totalorder %s21, 0
      %p73 = por %p71, %p72
      %s74 = smul.u32 %s22, 2
      %s75 = smul.u32 %s41, 2
      %s76 = ssub.s32 %s74, %s75
      %s77 = ssub.s32 %s23, %s37
      %s78 = sor.u32 %s76, %s77
      %s79 = ssub.s32 %s24, %s33
      %s80 = sor.u32 %s78, %s79
      %p81 = scmp.eq.s32.totalorder %s80, 0
      %s83 = sadd.s32 %s82, 1
      %s84 = scalar_select %p81, %s82, %s83
      %p87 = pneg %p81
      %p88 = scmp.eq.s32.totalorder %s15, 1
      %p89 = por %p87, %p88
      %p90 = scmp.ne.s32.totalorder %s82, %s85
      %p91 = scmp.eq.s32.totalorder %s15, 0
      %p92 = por %p90, %p91
      %p93 = scmp.ne.s32.totalorder %s82, %s85
      %p94 = scmp.eq.s32.totalorder %s20, 1
      %p95 = por %p93, %p94
      %p96 = scmp.ne.s32.totalorder %s85, %s86
      %p97 = scmp.eq.s32.totalorder %s20, 0
      %p98 = por %p96, %p97
      %p99 = scmp.ne.s32.totalorder %s85, %s86
      %p100 = scmp.eq.s32.totalorder %s21, 1
      %p101 = por %p99, %p100
      %p103 = scmp.ne.s32.totalorder %s86, %s102
      %p104 = scmp.eq.s32.totalorder %s21, 0
      %p105 = por %p103, %p104
      %p106 = scmp.le.s32.totalorder 1, %s15
      %p107 = scmp.lt.s32.totalorder %s15, 3
      %p108 = pnand %p106, %p107
      %p109 = pneg %p108
      // Predicated region
      $region9: #{tpu_custom_call.1} parent=5 // pred_check
        _
      $region10: #{tpu_custom_call.1} parent=5 // pred_check_branch
        %111 = sbr.rel (%p108) target = $region12
      $region11: #{tpu_custom_call.1} parent=5 // pred_region
        %s112 = ssub.s32 %s15, 1
      $region12: #{tpu_custom_call.1} parent=5 // pred_fallthru
        _
      %p113 = scmp.lt.s32.totalorder %s15, 2
      // Predicated region
      $region13: #{tpu_custom_call.1} parent=5 // pred_check
        %p114 = pneg %p113
      $region14: #{tpu_custom_call.1} parent=5 // pred_check_branch
        %116 = sbr.rel (%p114) target = $region16
      $region15: #{tpu_custom_call.1} parent=5 // pred_region
        // Predicated region
        $region17: #{tpu_custom_call.1} parent=15 // pred_check
          %p117 = pneg %p60
        $region18: #{tpu_custom_call.1} parent=15 // pred_check_branch
          %119 = sbr.rel (%p117) target = $region20
        $region19: #{tpu_custom_call.1} parent=15 // pred_region
          %s120 = sand.u32 %s50, 1
          %s121 = scalar_lea.sflag [#allocation5], %s120
          %s122 = sand.u32 %s50, 1
          %s123 = smul.addr %s122, 4
          %s124 = scalar_lea.vmem [#allocation4], %s123
          %s125 = smul.u32 %s22, 2
          %s126 = smul.u32 2, %s24
          %s128 = ssub.s32 64, 64
          %129 = vsyncadd %s121, %s128
          %s130 = smul.addr %s23, 2
          %s131 = sadd.s32 %s126, %s130
          %s132 = smul.addr %s125, 2
          %s133 = sadd.s32 %s131, %s132
          %s134 = smul.addr %s133, 32
          %s135 = scalar_lea.hbm %s1, %s134
          %s137 = sshll.u32 %s124, 4
          %s138 = int_to_ptr.vmem [resolvable:$true] %s137
          %140 = dma.hbm_to_vmem [thread:$0]  %s135, 64, %s138, %s121
        $region20: #{tpu_custom_call.1} parent=15 // pred_fallthru
          _
      $region16: #{tpu_custom_call.1} parent=5 // pred_fallthru
        _
      %p141 = scmp.le.s32.totalorder 1, %s15
      %p142 = scmp.lt.s32.totalorder %s15, 3
      %p143 = pnand %p141, %p142
      %p144 = pneg %p143
      // Predicated region
      $region21: #{tpu_custom_call.1} parent=5 // pred_check
        _
      $region22: #{tpu_custom_call.1} parent=5 // pred_check_branch
        %146 = sbr.rel (%p143) target = $region24
      $region23: #{tpu_custom_call.1} parent=5 // pred_region
        %s147 = ssub.s32 %s15, 1
        %s148 = sand.u32 %s53, 1
        %s149 = scalar_lea.sflag [#allocation5], %s148
        %s150 = sand.u32 %s53, 1
        %s151 = smul.addr %s150, 4
        %s152 = scalar_lea.vmem [#allocation4], %s151
        // Predicated region
        $region25: #{tpu_custom_call.1} parent=23 // pred_check
          %p153 = pneg %p66
        $region26: #{tpu_custom_call.1} parent=23 // pred_check_branch
          %155 = sbr.rel (%p153) target = $region28
        $region27: #{tpu_custom_call.1} parent=23 // pred_region
          %156 = dma.done %s149, 64
        $region28: #{tpu_custom_call.1} parent=23 // pred_fallthru
          _
        %s157 = sand.u32 %s53, 1
        %s158 = scalar_lea.sflag [#allocation5], %s157
        %s159 = sand.u32 %s53, 1
        %s160 = smul.addr %s159, 4
        %s161 = scalar_lea.vmem [#allocation4], %s160
        %p162 = pneg %p66
        %p163 = pneg %p63
        %p164 = pneg %p98
        %p165 = pneg %p95
        %s166 = sand.u32 %s85, 1
        %s167 = scalar_lea.sflag [#allocation6], %s166
        %s168 = sand.u32 %s85, 1
        %s169 = smul.addr %s168, 4
        %s170 = scalar_lea.vmem [#allocation7], %s169
        %s171 = smul.u32 %s25, 2
        %s172 = smul.u32 2, %s27
        %s173 = smul.u32 %s25, 2
        %s174 = smul.u32 2, %s27
        %v175 = vld [vmem:[%s152] sm:$0xf]
        %v176 = vlaneseq
        %v177 = vshrl.u32 %v176, 7
        %s178 = smul.u32 %s26, 2
        %v179 = vstv %s178
        %v180 = vadd.s32 %v177, %v179
        %v181 = vlaneseq
        %v182 = vand.u32 %v181, 127
        %v183 = vadd.s32 %v182, 128
        %s184 = smul.u32 %s27, 256
        %v185 = vstv %s184
        %v186 = vadd.s32 %v182, %v185
        %v187 = vadd.s32 %v183, %v185
        %s188 = smul.u32 %s25, 2
        %v189 = vstv %s188
        %v190 = vadd.s32 %v189, %v180
        %v191 = vmul.u32 %v190, 256
        %v192 = vadd.s32 %v191, %v186
        %v193 = vadd.s32 %v191, %v187
        %s194 = sld [smem:[#allocation3]]
        %s195 = smul.u32 %s194, 2654435769
        %v196 = vstv %s195
        %v197 = vxor.u32 %v192, %v196
        %v198 = vxor.u32 %v193, %v196
        %v199 = vshrl.u32 %v197, 16
        %v200 = vshrl.u32 %v198, 16
        %v201 = vxor.u32 %v197, %v199
        %v202 = vxor.u32 %v198, %v200
        %v203 = vmul.u32 %v201, 2146121005
        %v204 = vmul.u32 %v202, 2146121005
        %v205 = vshrl.u32 %v203, 15
        %v206 = vshrl.u32 %v204, 15
        %v207 = vxor.u32 %v203, %v205
        %v208 = vxor.u32 %v204, %v206
        %v209 = vmul.u32 %v207, 2221713035
        %v210 = vmul.u32 %v208, 2221713035
        %v211 = vshrl.u32 %v209, 16
        %v212 = vshrl.u32 %v210, 16
        %v213 = vxor.u32 %v209, %v211
        %v214 = vxor.u32 %v210, %v212
        %vm215 = vcmp.ge.u32.totalorder %v213, 1288490189
        %vm216 = vcmp.ge.u32.totalorder %v214, 1288490189
        %v217 = vsel %vm215, 1.4285715, 0.0
        %v218 = vsel %vm216, 1.4285715, 0.0
        %v221 = vcombine.low %v217, %v218
        %v223 = vunpack.c.l.s4 1983009808
        %v224 = vunpack.c.0.s8 %v223
        %v225 = vlaneseq
        %v226 = vshrl.u32 %v225, 7
        %v227 = vsub.s32 %v224, %v226
        %v228 = vrot.slane %v221, %v227
        %v230 = vmul.f32 %v175, %v228
        %231 = vst [vmem:[%s170] sm:$0xf] %v230
        %s232 = sand.u32 %s85, 1
        %s233 = scalar_lea.sflag [#allocation6], %s232
        %s234 = sand.u32 %s85, 1
        %s235 = smul.addr %s234, 4
        %s236 = scalar_lea.vmem [#allocation7], %s235
        // Predicated region
        $region29: #{tpu_custom_call.1} parent=23 // pred_check
          %p237 = pneg %p95
        $region30: #{tpu_custom_call.1} parent=23 // pred_check_branch
          %239 = sbr.rel (%p237) target = $region32
        $region31: #{tpu_custom_call.1} parent=23 // pred_region
          %s240 = smul.u32 %s25, 2
          %s241 = smul.u32 2, %s27
          %s243 = ssub.s32 64, 64
          %244 = vsyncadd %s233, %s243
          %s245 = smul.addr %s26, 2
          %s246 = sadd.s32 %s241, %s245
          %s247 = smul.addr %s240, 2
          %s248 = sadd.s32 %s246, %s247
          %s249 = smul.addr %s248, 32
          %s250 = scalar_lea.hbm %s2, %s249
          %s252 = sshll.u32 %s236, 4
          %s253 = int_to_ptr.vmem [resolvable:$true] %s252
          %255 = dma.vmem_to_hbm [thread:$0]  %s253, 64, %s250, %s233
        $region32: #{tpu_custom_call.1} parent=23 // pred_fallthru
          _
      $region24: #{tpu_custom_call.1} parent=5 // pred_fallthru
        _
      %p256 = scmp.le.s32.totalorder 2, %s15
      // Predicated region
      $region33: #{tpu_custom_call.1} parent=5 // pred_check
        %p257 = pneg %p256
      $region34: #{tpu_custom_call.1} parent=5 // pred_check_branch
        %259 = sbr.rel (%p257) target = $region36
      $region35: #{tpu_custom_call.1} parent=5 // pred_region
        %s260 = ssub.s32 %s15, 2
        // Predicated region
        $region37: #{tpu_custom_call.1} parent=35 // pred_check
          %p261 = pneg %p101
        $region38: #{tpu_custom_call.1} parent=35 // pred_check_branch
          %263 = sbr.rel (%p261) target = $region40
        $region39: #{tpu_custom_call.1} parent=35 // pred_region
          %s264 = sand.u32 %s86, 1
          %s265 = scalar_lea.sflag [#allocation6], %s264
          %s266 = sand.u32 %s86, 1
          %s267 = smul.addr %s266, 4
          %s268 = scalar_lea.vmem [#allocation7], %s267
          %269 = dma.done %s265, 64
        $region40: #{tpu_custom_call.1} parent=35 // pred_fallthru
          _
      $region36: #{tpu_custom_call.1} parent=5 // pred_fallthru
        _
    $region6: #{tpu_custom_call.1} parent=1 // loop_footer
      %s19 = sadd.s32 1, %s15
    $region7: #{tpu_custom_call.1} parent=1 // loop_footer_branch
      %14 = sbr.rel target = $region3
    $region8: #{tpu_custom_call.1} parent=1 // loop_exit
      _
    %270 = vsyncpa [#allocation5], 1
    %s271 = scalar_lea.sflag [#allocation5], 1
    %272 = vsyncpa %s271, 1
    %273 = vsyncpa [#allocation6], 1
    %s274 = scalar_lea.sflag [#allocation6], 1
    %275 = vsyncpa %s274, 1

</llo_original>
